<compile_context>
chip_gen: v6e
topology: v6e:2x2x1
jax: 0.10.0
libtpu: 0.0.40
codegen_flags: <defaults>
</compile_context>

<pallas_src>
import math

import jax
import jax.numpy as jnp
from jax.experimental import pallas as pl
from jax.experimental.pallas import tpu as pltpu

LANE = 128   # lane-dense last dim
SUB = 8      # f32 sublane


def _round_up(n, m):
    return ((n + m - 1) // m) * m


def ann_kernel(x_ref, w1t_ref, b1_ref, w2t_ref, b2_ref, out_x_ref, out_y_ref):
    """One (batch-tile, hidden-tile) step of the fused two-layer MLP.

    Grid = (batch tiles, hidden tiles). The hidden axis is the reduction axis
    of the second matmul; out_x is the resident accumulator across it.
    """
    h = pl.program_id(1)
    last_h = pl.num_programs(1) - 1

    # fc1 block: (tb, th) = relu(x @ W1^T[:, h-block] + b1[h-block])
    x = x_ref[...].astype(jnp.bfloat16)                      # bf16 MXU operand
    y = jnp.dot(x, w1t_ref[...], preferred_element_type=jnp.float32)
    y = jnp.maximum(y + b1_ref[...], 0.0)                    # f32 VPU
    out_y_ref[...] = y.astype(out_y_ref.dtype)

    # fc2 partial: accumulate y_block @ W2^T[h-block, :] into resident output.
    @pl.when(h == 0)
    def _():
        out_x_ref[...] = jnp.zeros_like(out_x_ref)

    out_x_ref[...] += jnp.dot(y.astype(jnp.bfloat16), w2t_ref[...],
                              preferred_element_type=jnp.float32)

    @pl.when(h == last_h)
    def _():
        out_x_ref[...] = jnp.maximum(out_x_ref[...] + b2_ref[...], 0.0)


def prepare_ann_params(w1, b1, w2, b2):
    """Pad + pre-transpose + cast the Linear params ONCE (model init time)."""
    H, G_in = w1.shape
    Kp = _round_up(G_in, LANE)
    Hp = _round_up(H, LANE)
    bf16, f32 = jnp.bfloat16, jnp.float32
    # [in, out] layout so kernel matmuls feed the MXU with no in-kernel .T
    w1_t = jnp.zeros((Kp, Hp), bf16).at[:G_in, :H].set(w1.T.astype(bf16))
    w2_t = jnp.zeros((Hp, Kp), bf16).at[:H, :G_in].set(w2.T.astype(bf16))
    b1_p = jnp.zeros((1, Hp), f32).at[0, :H].set(b1.astype(f32))
    b2_p = jnp.zeros((1, Kp), f32).at[0, :G_in].set(b2.astype(f32))
    return dict(w1_t=w1_t, w2_t=w2_t, b1_p=b1_p, b2_p=b2_p,
                G_in=G_in, H=H, Kp=Kp, Hp=Hp)


def _pick_tiles(B, Kp, Hp, batch_tile, hidden_tile, budget_bytes):
    """Pick (tb, th) that fit the VMEM budget (re-derived for v7x's 64 MiB)."""
    tb = min(_round_up(batch_tile, SUB), _round_up(B, SUB))
    th = min(_round_up(hidden_tile, LANE), Hp)

    def est(tb_, th_):
        return (2 * tb_ * Kp * 4        # x tile (f32, double buffered)
                + 2 * Kp * th_ * 2      # W1^T block (bf16)
                + 2 * th_ * Kp * 2      # W2^T block (bf16)
                + 2 * SUB * th_ * 4     # b1 (sublane-padded)
                + 2 * SUB * Kp * 4      # b2
                + 2 * tb_ * Kp * 4      # out_x block (f32 resident accumulator)
                + 2 * tb_ * th_ * 4)    # out_y block (f32)

    while est(tb, th) > budget_bytes and th > LANE:
        th = max(LANE, _round_up(th // 2, LANE))
    while est(tb, th) > budget_bytes and tb > SUB:
        tb = max(SUB, _round_up(tb // 2, SUB))
    return tb, th, est(tb, th)


def ann_forward(x, params, *, batch_tile=512, hidden_tile=512,
                vmem_budget_bytes=40 * 1024 * 1024):
    """Core forward: returns (relu(fc2(relu(fc1(x)))), relu(fc1(x)))."""
    B, G_in = x.shape
    assert G_in == params["G_in"], "input feature dim mismatch"
    Kp, Hp, H = params["Kp"], params["Hp"], params["H"]
    f32 = jnp.float32

    tb, th, est = _pick_tiles(B, Kp, Hp, batch_tile, hidden_tile,
                              vmem_budget_bytes)
    Bp = _round_up(B, tb)

    # Pad x only when needed (skip the copy for already-aligned inputs).
    x = x.astype(f32)
    if Bp == B and Kp == G_in:
        x_p = x
    else:
        x_p = jnp.zeros((Bp, Kp), f32).at[:B, :G_in].set(x)

    grid = (Bp // tb, Hp // th)

    cost = pl.CostEstimate(
        flops=4 * Bp * Kp * Hp,                      # two matmuls, 2 flops/MAC
        transcendentals=0,
        bytes_accessed=(Bp * Kp * 4                  # x read
                        + Kp * Hp * 2 + Hp * Kp * 2  # bf16 weights
                        + Hp * 4 + Kp * 4            # biases
                        + Bp * Kp * 4 + Bp * Hp * 4  # outputs
                        ),
    )

    # Explicit scoped-VMEM limit: above v5e's 16 MiB default, below v7x's
    # 64 MiB physical.
    vmem_limit = int(min(max(2 * est, 32 * 1024 * 1024), 64 * 1024 * 1024))

    out_x_p, out_y_p = pl.pallas_call(
        ann_kernel,
        out_shape=(
            jax.ShapeDtypeStruct((Bp, Kp), f32),     # relu(fc2(...)) (padded)
            jax.ShapeDtypeStruct((Bp, Hp), f32),     # relu(fc1(x))   (padded)
        ),
        grid=grid,
        in_specs=[
            pl.BlockSpec((tb, Kp), lambda i, h: (i, 0)),   # x tile (reused over h)
            pl.BlockSpec((Kp, th), lambda i, h: (0, h)),   # W1^T column block
            pl.BlockSpec((1, th), lambda i, h: (0, h)),    # b1 block
            pl.BlockSpec((th, Kp), lambda i, h: (h, 0)),   # W2^T row block
            pl.BlockSpec((1, Kp), lambda i, h: (0, 0)),    # b2 (resident)
        ],
        out_specs=(
            pl.BlockSpec((tb, Kp), lambda i, h: (i, 0)),   # accumulates over h
            pl.BlockSpec((tb, th), lambda i, h: (i, h)),   # y written per block
        ),
        compiler_params=pltpu.CompilerParams(
            dimension_semantics=("parallel", "arbitrary"),
            vmem_limit_bytes=vmem_limit,
        ),
        cost_estimate=cost,
    )(x_p, params["w1_t"], params["b1_p"], params["w2_t"], params["b2_p"])

    return out_x_p[:B, :G_in], out_y_p[:B, :H]


def ann_apply(x, w1, b1, w2, b2, *, prepared=None, **kw):
    """Mirrors ann.forward(x) -> (x_out, y, ww1, ww2, bb1, bb2)."""
    if prepared is None:
        prepared = prepare_ann_params(w1, b1, w2, b2)
    out_x, out_y = ann_forward(x, prepared, **kw)
    # Module returns the parameters as-is alongside activations.
    return out_x, out_y, w1, w2, b1, b2


def xavier_uniform(key, shape):
    """Matches nn.init.xavier_uniform_ for a 2-D weight [fan_out, fan_in]."""
    fan_out, fan_in = shape
    bound = math.sqrt(6.0 / (fan_in + fan_out))
    return jax.random.uniform(key, shape, jnp.float32, -bound, bound)


if __name__ == "__main__":
    # Small shapes consistent with ann(G_in, w1): batch=8, G_in=16, hidden=32.
    B, G_in, H = 8, 16, 32

    key = jax.random.PRNGKey(0)
    k_x, k_w1, k_b1, k_w2, k_b2 = jax.random.split(key, 5)

    x = jax.random.normal(k_x, (B, G_in), jnp.float32)
    W1 = xavier_uniform(k_w1, (H, G_in))       # fc1.weight
    W2 = xavier_uniform(k_w2, (G_in, H))       # fc2.weight
    # The module's weight_init calls xavier on the 1-D biases (errors in
    # torch); use the default nn.Linear bias init deterministically instead.
    b1 = jax.random.uniform(k_b1, (H,), jnp.float32,
                            -1.0 / math.sqrt(G_in), 1.0 / math.sqrt(G_in))
    b2 = jax.random.uniform(k_b2, (G_in,), jnp.float32,
                            -1.0 / math.sqrt(H), 1.0 / math.sqrt(H))

    # Pad/transpose/cast the params ONCE (model-init time), reuse per forward.
    params = prepare_ann_params(W1, b1, W2, b2)

    out_x, out_y, ww1, ww2, bb1, bb2 = ann_apply(x, W1, b1, W2, b2,
                                                 prepared=params)
    jax.block_until_ready((out_x, out_y))

    # Reference check in plain JAX (f32); bf16 MXU operands with f32
    # accumulation -> loosened tolerance.
    y_ref = jnp.maximum(x @ W1.T + b1, 0.0)
    x_ref = jnp.maximum(y_ref @ W2.T + b2, 0.0)
    assert out_x.shape == (B, G_in) and out_y.shape == (B, H)
    assert jnp.allclose(out_y, y_ref, atol=3e-2, rtol=3e-2), "fc1 mismatch"
    assert jnp.allclose(out_x, x_ref, atol=3e-2, rtol=3e-2), "fc2 mismatch"

    print("KERNEL_OK")
</pallas_src>

<mosaic_0001>
module attributes {stable_mosaic.version = 11 : i64} {
  func.func @ann_kernel(%arg0: i32, %arg1: i32, %arg2: memref<8x128xf32, #tpu.memory_space<vmem>>, %arg3: memref<128x128xbf16, #tpu.memory_space<vmem>>, %arg4: memref<1x128xf32, #tpu.memory_space<vmem>>, %arg5: memref<128x128xbf16, #tpu.memory_space<vmem>>, %arg6: memref<1x128xf32, #tpu.memory_space<vmem>>, %arg7: memref<8x128xf32, #tpu.memory_space<vmem>>, %arg8: memref<8x128xf32, #tpu.memory_space<vmem>>) attributes {dimension_semantics = [#tpu.dimension_semantics<parallel>, #tpu.dimension_semantics<arbitrary>], iteration_bounds = array<i64: 1, 1>, scalar_prefetch = 0 : i64, scratch_operands = 0 : i64, tpu.core_type = #tpu.core_type<tc>, window_params = [{transform_indices = @transform_0, window_bounds = array<i64: 8, 128>}, {transform_indices = @transform_1, window_bounds = array<i64: 128, 128>}, {transform_indices = @transform_2, window_bounds = array<i64: 1, 128>}, {transform_indices = @transform_3, window_bounds = array<i64: 128, 128>}, {pipeline_mode = #tpu.pipeline_mode<synchronous>, transform_indices = @transform_4, window_bounds = array<i64: 1, 128>}, {transform_indices = @transform_5, window_bounds = array<i64: 8, 128>}, {transform_indices = @transform_6, window_bounds = array<i64: 8, 128>}]} {
    %c0 = arith.constant 0 : index
    %c0_0 = arith.constant 0 : index
    %0 = vector.load %arg2[%c0, %c0_0] : memref<8x128xf32, #tpu.memory_space<vmem>>, vector<8x128xf32>
    %1 = arith.truncf %0 : vector<8x128xf32> to vector<8x128xbf16>
    %c0_1 = arith.constant 0 : index
    %c0_2 = arith.constant 0 : index
    %2 = vector.load %arg3[%c0_1, %c0_2] : memref<128x128xbf16, #tpu.memory_space<vmem>>, vector<128x128xbf16>
    %cst = arith.constant dense<0.000000e+00> : vector<8x128xf32>
    %3 = tpu.matmul %1, %2, %cst {dimension_numbers = #tpu.dot_dimension_numbers<[1], [0], [0], [1], [0, 0, 1, 1], [], []>} : vector<8x128xbf16>, vector<128x128xbf16>, vector<8x128xf32> -> vector<8x128xf32>
    %c0_3 = arith.constant 0 : index
    %c0_4 = arith.constant 0 : index
    %4 = vector.load %arg4[%c0_3, %c0_4] : memref<1x128xf32, #tpu.memory_space<vmem>>, vector<1x128xf32>
    %5 = vector.broadcast %4 : vector<1x128xf32> to vector<8x128xf32>
    %6 = arith.addf %3, %5 : vector<8x128xf32>
    %cst_5 = arith.constant 0.000000e+00 : f32
    %7 = vector.broadcast %cst_5 : f32 to vector<8x128xf32>
    %8 = arith.maximumf %6, %7 : vector<8x128xf32>
    %c0_6 = arith.constant 0 : index
    %c0_7 = arith.constant 0 : index
    %9 = vector.load %arg8[%c0_6, %c0_7] : memref<8x128xf32, #tpu.memory_space<vmem>>, vector<8x128xf32>
    tpu.vector_store %arg8[%c0_6, %c0_7], %8 {strides = array<i32>} : memref<8x128xf32, #tpu.memory_space<vmem>>, vector<8x128xf32>,
    %c0_i32 = arith.constant 0 : i32
    %10 = arith.cmpi eq, %arg1, %c0_i32 : i32
    %11 = arith.extui %10 : i1 to i32
    %c0_i32_8 = arith.constant 0 : i32
    %12 = arith.cmpi ne, %11, %c0_i32_8 : i32
    scf.if %12 {
      %cst_18 = arith.constant 0.000000e+00 : f32
      %22 = vector.broadcast %cst_18 : f32 to vector<8x128xf32>
      %c0_19 = arith.constant 0 : index
      %c0_20 = arith.constant 0 : index
      %23 = vector.load %arg7[%c0_19, %c0_20] : memref<8x128xf32, #tpu.memory_space<vmem>>, vector<8x128xf32>
      tpu.vector_store %arg7[%c0_19, %c0_20], %22 {strides = array<i32>} : memref<8x128xf32, #tpu.memory_space<vmem>>, vector<8x128xf32>,
    } else {
    }
    %c0_9 = arith.constant 0 : index
    %c0_10 = arith.constant 0 : index
    %13 = vector.load %arg7[%c0_9, %c0_10] : memref<8x128xf32, #tpu.memory_space<vmem>>, vector<8x128xf32>
    %14 = arith.truncf %8 : vector<8x128xf32> to vector<8x128xbf16>
    %c0_11 = arith.constant 0 : index
    %c0_12 = arith.constant 0 : index
    %15 = vector.load %arg5[%c0_11, %c0_12] : memref<128x128xbf16, #tpu.memory_space<vmem>>, vector<128x128xbf16>
    %cst_13 = arith.constant dense<0.000000e+00> : vector<8x128xf32>
    %16 = tpu.matmul %14, %15, %cst_13 {dimension_numbers = #tpu.dot_dimension_numbers<[1], [0], [0], [1], [0, 0, 1, 1], [], []>} : vector<8x128xbf16>, vector<128x128xbf16>, vector<8x128xf32> -> vector<8x128xf32>
    %17 = arith.addf %13, %16 : vector<8x128xf32>
    %c0_14 = arith.constant 0 : index
    %c0_15 = arith.constant 0 : index
    %18 = vector.load %arg7[%c0_14, %c0_15] : memref<8x128xf32, #tpu.memory_space<vmem>>, vector<8x128xf32>
    tpu.vector_store %arg7[%c0_14, %c0_15], %17 {strides = array<i32>} : memref<8x128xf32, #tpu.memory_space<vmem>>, vector<8x128xf32>,
    %c0_i32_16 = arith.constant 0 : i32
    %19 = arith.cmpi eq, %arg1, %c0_i32_16 : i32
    %20 = arith.extui %19 : i1 to i32
    %c0_i32_17 = arith.constant 0 : i32
    %21 = arith.cmpi ne, %20, %c0_i32_17 : i32
    scf.if %21 {
      %c0_18 = arith.constant 0 : index
      %c0_19 = arith.constant 0 : index
      %22 = vector.load %arg7[%c0_18, %c0_19] : memref<8x128xf32, #tpu.memory_space<vmem>>, vector<8x128xf32>
      %c0_20 = arith.constant 0 : index
      %c0_21 = arith.constant 0 : index
      %23 = vector.load %arg6[%c0_20, %c0_21] : memref<1x128xf32, #tpu.memory_space<vmem>>, vector<1x128xf32>
      %24 = vector.broadcast %23 : vector<1x128xf32> to vector<8x128xf32>
      %25 = arith.addf %22, %24 : vector<8x128xf32>
      %cst_22 = arith.constant 0.000000e+00 : f32
      %26 = vector.broadcast %cst_22 : f32 to vector<8x128xf32>
      %27 = arith.maximumf %25, %26 : vector<8x128xf32>
      %c0_23 = arith.constant 0 : index
      %c0_24 = arith.constant 0 : index
      %28 = vector.load %arg7[%c0_23, %c0_24] : memref<8x128xf32, #tpu.memory_space<vmem>>, vector<8x128xf32>
      tpu.vector_store %arg7[%c0_23, %c0_24], %27 {strides = array<i32>} : memref<8x128xf32, #tpu.memory_space<vmem>>, vector<8x128xf32>,
    } else {
    }
    return
  }
  func.func @transform_0(%arg0: i32, %arg1: i32) -> (i32, i32) {
    %c0_i32 = arith.constant 0 : i32
    %c0_i32_0 = arith.constant 0 : i32
    return %arg0, %c0_i32 : i32, i32
  }
  func.func @transform_1(%arg0: i32, %arg1: i32) -> (i32, i32) {
    %c0_i32 = arith.constant 0 : i32
    %c0_i32_0 = arith.constant 0 : i32
    return %c0_i32, %arg1 : i32, i32
  }
  func.func @transform_2(%arg0: i32, %arg1: i32) -> (i32, i32) {
    %c0_i32 = arith.constant 0 : i32
    %c0_i32_0 = arith.constant 0 : i32
    return %c0_i32, %arg1 : i32, i32
  }
  func.func @transform_3(%arg0: i32, %arg1: i32) -> (i32, i32) {
    %c0_i32 = arith.constant 0 : i32
    %c0_i32_0 = arith.constant 0 : i32
    return %arg1, %c0_i32 : i32, i32
  }
  func.func @transform_4(%arg0: i32, %arg1: i32) -> (i32, i32) {
    %c0_i32 = arith.constant 0 : i32
    %c0_i32_0 = arith.constant 0 : i32
    %c0_i32_1 = arith.constant 0 : i32
    return %c0_i32, %c0_i32_0 : i32, i32
  }
  func.func @transform_5(%arg0: i32, %arg1: i32) -> (i32, i32) {
    %c0_i32 = arith.constant 0 : i32
    %c0_i32_0 = arith.constant 0 : i32
    return %arg0, %c0_i32 : i32, i32
  }
  func.func @transform_6(%arg0: i32, %arg1: i32) -> (i32, i32) {
    %c0_i32 = arith.constant 0 : i32
    return %arg0, %arg1 : i32, i32
  }
}

</mosaic_0001>

<llo_original>
// kernel: tpu_custom_call.1
$region0: #{tpu_custom_call.1}
  #allocation0 [shape = 'u32[]', space=smem, size = 0x4, offset = 0x4, fixed_abs, tag = 'smem constant byte address 0x4 - core index']
  #allocation1 [shape = 'u32[144,128]{1,0:T(1,128)}', space=vmem, size = 0x12000, scoped, tag = 'internal scratch']
  %s0 = inlined_call_operand.hbm [shape: f32[8,128], index: 0, kind: input, shape index: {}]
  %s1 = inlined_call_operand.hbm [shape: bf16[128,128], index: 1, kind: input, shape index: {}]
  %s2 = inlined_call_operand.vmem [shape: f32[1,128], index: 2, kind: input, shape index: {}]
  %s3 = inlined_call_operand.hbm [shape: bf16[128,128], index: 3, kind: input, shape index: {}]
  %s4 = inlined_call_operand.vmem [shape: f32[1,128], index: 4, kind: input, shape index: {}]
  %s5 = inlined_call_operand.hbm [shape: f32[8,128], index: 5, kind: output, shape index: {0}]
  %s6 = inlined_call_operand.hbm [shape: f32[8,128], index: 6, kind: output, shape index: {1}]
  %7 = xla_tuple %s5, %s6
  %s8 = sld [smem:[#allocation0]]
  $region58: #{tpu_custom_call.1} parent=0
    _
  %s10 = ssub.s32 1, %s8
  %s11 = scalar_select 0, %s10, %s8
  $region1: #{tpu_custom_call.1} parent=0
    #allocation2 [shape = 'u8[4096]{0}', space=vmem, size = 0x1000, scoped, tag = 'input window, operand 0, single buffered']
    #allocation3 [shape = 's32[1]{0}', space=sflag, size = 0x4, scoped, tag = 'scoped memory for tpu_custom_call.1']
    #allocation4 [shape = 's32[1]{0}', space=sflag, size = 0x4, scoped, tag = 'scoped memory for tpu_custom_call.1']
    #allocation5 [shape = 'u8[32768]{0}', space=vmem, size = 0x8000, scoped, tag = 'input window, operand 1, single buffered']
    #allocation6 [shape = 's32[1]{0}', space=sflag, size = 0x4, scoped, tag = 'scoped memory for tpu_custom_call.1']
    #allocation7 [shape = 'u8[32768]{0}', space=vmem, size = 0x8000, scoped, tag = 'input window, operand 3, single buffered']
    #allocation8 [shape = 'u8[4096]{0}', space=vmem, size = 0x1000, scoped, tag = 'output window, operand 0, single buffered']
    #allocation9 [shape = 'u8[4096]{0}', space=vmem, size = 0x1000, scoped, tag = 'output window, operand 1, single buffered']
    #allocation10 [shape = 's32[1]{0}', space=sflag, size = 0x4, scoped, tag = 'scoped memory for tpu_custom_call.1']
    %12 = vsyncpa [#allocation3], 0
    %13 = vsyncpa [#allocation6], 0
    %14 = vsyncpa [#allocation4], 0
    %15 = vsyncpa [#allocation10], 0
    // Predicated region
    $region2: #{tpu_custom_call.1} parent=1 // pred_check
      _
    $region3: #{tpu_custom_call.1} parent=1 // pred_check_branch
      %17 = sbr.rel (0) target = $region5
    $region4: #{tpu_custom_call.1} parent=1 // pred_region
      %s19 = ssub.s32 128, 128
      %20 = vsyncadd [#allocation3], %s19
      %s22 = sshll.u32 [#allocation2], 4
      %s23 = int_to_ptr.vmem [resolvable:$true] %s22
      %25 = dma.hbm_to_vmem [thread:$0]  %s0, 128, %s23, [#allocation3]
    $region5: #{tpu_custom_call.1} parent=1 // pred_fallthru
      _
    // Predicated region
    $region6: #{tpu_custom_call.1} parent=1 // pred_check
      _
    $region7: #{tpu_custom_call.1} parent=1 // pred_check_branch
      %27 = sbr.rel (0) target = $region9
    $region8: #{tpu_custom_call.1} parent=1 // pred_region
      %s29 = ssub.s32 1024, 1024
      %30 = vsyncadd [#allocation6], %s29
      %s31 = sshll.u32 [#allocation5], 4
      %s32 = int_to_ptr.vmem [resolvable:$true] %s31
      %37 = dma.hbm_to_vmem [thread:$0]  %s1, 1024, %s32, [#allocation6], 64, 64, 4
    $region9: #{tpu_custom_call.1} parent=1 // pred_fallthru
      _
    // Predicated region
    $region10: #{tpu_custom_call.1} parent=1 // pred_check
      _
    $region11: #{tpu_custom_call.1} parent=1 // pred_check_branch
      %39 = sbr.rel (0) target = $region13
    $region12: #{tpu_custom_call.1} parent=1 // pred_region
      _
    $region13: #{tpu_custom_call.1} parent=1 // pred_fallthru
      _
    // Predicated region
    $region14: #{tpu_custom_call.1} parent=1 // pred_check
      _
    $region15: #{tpu_custom_call.1} parent=1 // pred_check_branch
      %41 = sbr.rel (0) target = $region17
    $region16: #{tpu_custom_call.1} parent=1 // pred_region
      %s43 = ssub.s32 1024, 1024
      %44 = vsyncadd [#allocation6], %s43
      %s45 = sshll.u32 [#allocation7], 4
      %s46 = int_to_ptr.vmem [resolvable:$true] %s45
      %51 = dma.hbm_to_vmem [thread:$0]  %s3, 1024, %s46, [#allocation6], 64, 64, 4
    $region17: #{tpu_custom_call.1} parent=1 // pred_fallthru
      _
    // Predicated region
    $region18: #{tpu_custom_call.1} parent=1 // pred_check
      _
    $region19: #{tpu_custom_call.1} parent=1 // pred_check_branch
      %53 = sbr.rel (0) target = $region21
    $region20: #{tpu_custom_call.1} parent=1 // pred_region
      _
    $region21: #{tpu_custom_call.1} parent=1 // pred_fallthru
      _
    // Predicated region
    $region22: #{tpu_custom_call.1} parent=1 // pred_check
      _
    $region23: #{tpu_custom_call.1} parent=1 // pred_check_branch
      %55 = sbr.rel (0) target = $region25
    $region24: #{tpu_custom_call.1} parent=1 // pred_region
      %56 = dma.done [#allocation3], 128
    $region25: #{tpu_custom_call.1} parent=1 // pred_fallthru
      _
    // Predicated region
    $region26: #{tpu_custom_call.1} parent=1 // pred_check
      _
    $region27: #{tpu_custom_call.1} parent=1 // pred_check_branch
      %58 = sbr.rel (0) target = $region29
    $region28: #{tpu_custom_call.1} parent=1 // pred_region
      %59 = dma.done [#allocation6], 1024
    $region29: #{tpu_custom_call.1} parent=1 // pred_fallthru
      _
    // Predicated region
    $region30: #{tpu_custom_call.1} parent=1 // pred_check
      _
    $region31: #{tpu_custom_call.1} parent=1 // pred_check_branch
      %61 = sbr.rel (0) target = $region33
    $region32: #{tpu_custom_call.1} parent=1 // pred_region
      %62 = dma.done [#allocation6], 1024
    $region33: #{tpu_custom_call.1} parent=1 // pred_fallthru
      _
    %v64 = vld [vmem:[#allocation2] sm:$0xff]
    %v65 = vpack.c.bf16 %v64, %v64
    %v66 = vld [vmem:[#allocation5] sm:$0xf]
    %v67 = vld [vmem:[#allocation5 + $0x4] sm:$0xf]
    %v68 = vld [vmem:[#allocation5 + $0x8] sm:$0xf]
    %v69 = vld [vmem:[#allocation5 + $0xc] sm:$0xf]
    %v70 = vld [vmem:[#allocation5 + $0x10] sm:$0xf]
    %v71 = vld [vmem:[#allocation5 + $0x14] sm:$0xf]
    %v72 = vld [vmem:[#allocation5 + $0x18] sm:$0xf]
    %v73 = vld [vmem:[#allocation5 + $0x1c] sm:$0xf]
    %v74 = vld [vmem:[#allocation5 + $0x20] sm:$0xf]
    %v75 = vld [vmem:[#allocation5 + $0x24] sm:$0xf]
    %v76 = vld [vmem:[#allocation5 + $0x28] sm:$0xf]
    %v77 = vld [vmem:[#allocation5 + $0x2c] sm:$0xf]
    %v78 = vld [vmem:[#allocation5 + $0x30] sm:$0xf]
    %v79 = vld [vmem:[#allocation5 + $0x34] sm:$0xf]
    %v80 = vld [vmem:[#allocation5 + $0x38] sm:$0xf]
    %v81 = vld [vmem:[#allocation5 + $0x3c] sm:$0xf]
    %v82 = vld [vmem:[%s2] sm:$0x1]
    %v84 = vlaneseq
    %v85 = vshrl.u32 %v84, 7
    %v86 = vsub.s32 0, %v85
    %v87 = vrot.slane %v82, %v86
    %v105 = vunpack.c.l.b16 %v66
    %v106 = vunpack.c.l.b16 %v67
    %v107 = vunpack.c.l.b16 %v68
    %v108 = vunpack.c.l.b16 %v69
    %v109 = vunpack.c.l.b16 %v70
    %v110 = vunpack.c.l.b16 %v71
    %v111 = vunpack.c.l.b16 %v72
    %v112 = vunpack.c.l.b16 %v73
    %v113 = vunpack.c.l.b16 %v74
    %v114 = vunpack.c.l.b16 %v75
    %v115 = vunpack.c.l.b16 %v76
    %v116 = vunpack.c.l.b16 %v77
    %v117 = vunpack.c.l.b16 %v78
    %v118 = vunpack.c.l.b16 %v79
    %v119 = vunpack.c.l.b16 %v80
    %v120 = vunpack.c.l.b16 %v81
    %v121 = vpack.c.b16 %v106, %v105
    %v122 = vpack.c.b16 %v108, %v107
    %v123 = vpack.c.b16 %v110, %v109
    %v124 = vpack.c.b16 %v112, %v111
    %v125 = vpack.c.b16 %v114, %v113
    %v126 = vpack.c.b16 %v116, %v115
    %v127 = vpack.c.b16 %v118, %v117
    %v128 = vpack.c.b16 %v120, %v119
    %137 = vmatprep.subr.bf16.mxu0 0
    %138 = vmatpush1.bf16.msra.mxu0 %v128
    %139 = vmatprep.subr.bf16.mxu0 0
    %140 = vmatpush1.bf16.msra.mxu0 %v127
    %141 = vmatprep.subr.bf16.mxu0 0
    %142 = vmatpush1.bf16.msra.mxu0 %v126
    %143 = vmatprep.subr.bf16.mxu0 0
    %144 = vmatpush1.bf16.msra.mxu0 %v125
    %145 = vmatprep.subr.bf16.mxu0 0
    %146 = vmatpush1.bf16.msra.mxu0 %v124
    %147 = vmatprep.subr.bf16.mxu0 0
    %148 = vmatpush1.bf16.msra.mxu0 %v123
    %149 = vmatprep.subr.bf16.mxu0 0
    %150 = vmatpush1.bf16.msra.mxu0 %v122
    %151 = vmatprep.subr.bf16.mxu0 0
    %152 = vmatpush1.bf16.msra.mxu0 %v121
    %153 = vmatprep.subr.bf16.mxu0 0
    %154 = vmatpush2.bf16.msra.mxu0 0
    %155 = vmatprep.subr.bf16.mxu0 0
    %156 = vmatpush2.bf16.msra.mxu0 0
    %157 = vmatprep.subr.bf16.mxu0 0
    %158 = vmatpush2.bf16.msra.mxu0 0
    %159 = vmatprep.subr.bf16.mxu0 0
    %160 = vmatpush2.bf16.msra.mxu0 0
    %161 = vmatprep.subr.bf16.mxu0 0
    %162 = vmatpush2.bf16.msra.mxu0 0
    %163 = vmatprep.subr.bf16.mxu0 0
    %164 = vmatpush2.bf16.msra.mxu0 0
    %165 = vmatprep.subr.bf16.mxu0 0
    %166 = vmatpush2.bf16.msra.mxu0 0
    %167 = vmatprep.subr.bf16.mxu0 0
    %168 = vmatpush2.bf16.msra.mxu0 0
    %169 = vmatprep.mubr.bf16.mxu0 0
    %170 = vmatmul.mubr.bf16.gmra.mxu0 %v65
    %v171 = vpop.f32.mrf.mxu0
    %v172 = vadd.f32 %v87, %v171
    %v173 = vpop.f32.mrf.mxu0
    %v174 = vpop.f32.mrf.mxu0
    %v175 = vpop.f32.mrf.mxu0
    %176 = vdwg.mxu0
    %v177 = vmax.f32 %v172, 0.0
    %178 = vst [vmem:[#allocation9] sm:$0xff] %v177
    %p179 = scmp.eq.s32.totalorder 0, 0
    // Predicated region
    $region34: #{tpu_custom_call.1} parent=1 // pred_check
      %p180 = pneg %p179
    $region35: #{tpu_custom_call.1} parent=1 // pred_check_branch
      %182 = sbr.rel (%p180) target = $region37
    $region36: #{tpu_custom_call.1} parent=1 // pred_region
      %183 = vst [vmem:[#allocation8] sm:$0xff] 0.0
    $region37: #{tpu_custom_call.1} parent=1 // pred_fallthru
      _
    %v184 = vld [vmem:[#allocation8] sm:$0xff]
    %v185 = vpack.c.bf16 %v177, %v177
    %v186 = vld [vmem:[#allocation7] sm:$0xf]
    %v187 = vld [vmem:[#allocation7 + $0x4] sm:$0xf]
    %v188 = vld [vmem:[#allocation7 + $0x8] sm:$0xf]
    %v189 = vld [vmem:[#allocation7 + $0xc] sm:$0xf]
    %v190 = vld [vmem:[#allocation7 + $0x10] sm:$0xf]
    %v191 = vld [vmem:[#allocation7 + $0x14] sm:$0xf]
    %v192 = vld [vmem:[#allocation7 + $0x18] sm:$0xf]
    %v193 = vld [vmem:[#allocation7 + $0x1c] sm:$0xf]
    %v194 = vld [vmem:[#allocation7 + $0x20] sm:$0xf]
    %v195 = vld [vmem:[#allocation7 + $0x24] sm:$0xf]
    %v196 = vld [vmem:[#allocation7 + $0x28] sm:$0xf]
    %v197 = vld [vmem:[#allocation7 + $0x2c] sm:$0xf]
    %v198 = vld [vmem:[#allocation7 + $0x30] sm:$0xf]
    %v199 = vld [vmem:[#allocation7 + $0x34] sm:$0xf]
    %v200 = vld [vmem:[#allocation7 + $0x38] sm:$0xf]
    %v201 = vld [vmem:[#allocation7 + $0x3c] sm:$0xf]
    %v218 = vunpack.c.l.b16 %v186
    %v219 = vunpack.c.l.b16 %v187
    %v220 = vunpack.c.l.b16 %v188
    %v221 = vunpack.c.l.b16 %v189
    %v222 = vunpack.c.l.b16 %v190
    %v223 = vunpack.c.l.b16 %v191
    %v224 = vunpack.c.l.b16 %v192
    %v225 = vunpack.c.l.b16 %v193
    %v226 = vunpack.c.l.b16 %v194
    %v227 = vunpack.c.l.b16 %v195
    %v228 = vunpack.c.l.b16 %v196
    %v229 = vunpack.c.l.b16 %v197
    %v230 = vunpack.c.l.b16 %v198
    %v231 = vunpack.c.l.b16 %v199
    %v232 = vunpack.c.l.b16 %v200
    %v233 = vunpack.c.l.b16 %v201
    %v234 = vpack.c.b16 %v219, %v218
    %v235 = vpack.c.b16 %v221, %v220
    %v236 = vpack.c.b16 %v223, %v222
    %v237 = vpack.c.b16 %v225, %v224
    %v238 = vpack.c.b16 %v227, %v226
    %v239 = vpack.c.b16 %v229, %v228
    %v240 = vpack.c.b16 %v231, %v230
    %v241 = vpack.c.b16 %v233, %v232
    %250 = vmatprep.subr.bf16.mxu0 0
    %251 = vmatpush1.bf16.msra.mxu0 %v241
    %252 = vmatprep.subr.bf16.mxu0 0
    %253 = vmatpush1.bf16.msra.mxu0 %v240
    %254 = vmatprep.subr.bf16.mxu0 0
    %255 = vmatpush1.bf16.msra.mxu0 %v239
    %256 = vmatprep.subr.bf16.mxu0 0
    %257 = vmatpush1.bf16.msra.mxu0 %v238
    %258 = vmatprep.subr.bf16.mxu0 0
    %259 = vmatpush1.bf16.msra.mxu0 %v237
    %260 = vmatprep.subr.bf16.mxu0 0
    %261 = vmatpush1.bf16.msra.mxu0 %v236
    %262 = vmatprep.subr.bf16.mxu0 0
    %263 = vmatpush1.bf16.msra.mxu0 %v235
    %264 = vmatprep.subr.bf16.mxu0 0
    %265 = vmatpush1.bf16.msra.mxu0 %v234
    %266 = vmatprep.subr.bf16.mxu0 0
    %267 = vmatpush2.bf16.msra.mxu0 0
    %268 = vmatprep.subr.bf16.mxu0 0
    %269 = vmatpush2.bf16.msra.mxu0 0
    %270 = vmatprep.subr.bf16.mxu0 0
    %271 = vmatpush2.bf16.msra.mxu0 0
    %272 = vmatprep.subr.bf16.mxu0 0
    %273 = vmatpush2.bf16.msra.mxu0 0
    %274 = vmatprep.subr.bf16.mxu0 0
    %275 = vmatpush2.bf16.msra.mxu0 0
    %276 = vmatprep.subr.bf16.mxu0 0
    %277 = vmatpush2.bf16.msra.mxu0 0
    %278 = vmatprep.subr.bf16.mxu0 0
    %279 = vmatpush2.bf16.msra.mxu0 0
    %280 = vmatprep.subr.bf16.mxu0 0
    %281 = vmatpush2.bf16.msra.mxu0 0
    %282 = vmatprep.mubr.bf16.mxu0 0
    %283 = vmatmul.mubr.bf16.gmra.mxu0 %v185
    %v284 = vpop.f32.mrf.mxu0
    %v285 = vadd.f32 0.0, %v284
    %v286 = vpop.f32.mrf.mxu0
    %v287 = vpop.f32.mrf.mxu0
    %v288 = vpop.f32.mrf.mxu0
    %289 = vdwg.mxu0
    %v290 = vadd.f32 %v184, %v285
    %291 = vst [vmem:[#allocation8] sm:$0xff] %v290
    // Predicated region
    $region38: #{tpu_custom_call.1} parent=1 // pred_check
      %p292 = pneg %p179
    $region39: #{tpu_custom_call.1} parent=1 // pred_check_branch
      %294 = sbr.rel (%p292) target = $region41
    $region40: #{tpu_custom_call.1} parent=1 // pred_region
      %v295 = vld [vmem:[#allocation8] sm:$0xff]
      %v296 = vld [vmem:[%s4] sm:$0x1]
      %v298 = vlaneseq
      %v299 = vshrl.u32 %v298, 7
      %v300 = vsub.s32 0, %v299
      %v301 = vrot.slane %v296, %v300
      %v303 = vadd.f32 %v295, %v301
      %v304 = vmax.f32 %v303, 0.0
      %305 = vst [vmem:[#allocation8] sm:$0xff] %v304
    $region41: #{tpu_custom_call.1} parent=1 // pred_fallthru
      _
    // Predicated region
    $region42: #{tpu_custom_call.1} parent=1 // pred_check
      _
    $region43: #{tpu_custom_call.1} parent=1 // pred_check_branch
      %307 = sbr.rel (0) target = $region45
    $region44: #{tpu_custom_call.1} parent=1 // pred_region
      %s309 = ssub.s32 128, 128
      %310 = vsyncadd [#allocation4], %s309
      %s312 = sshll.u32 [#allocation8], 4
      %s313 = int_to_ptr.vmem [resolvable:$true] %s312
      %315 = dma.vmem_to_hbm [thread:$0]  %s313, 128, %s5, [#allocation4]
    $region45: #{tpu_custom_call.1} parent=1 // pred_fallthru
      _
    // Predicated region
    $region46: #{tpu_custom_call.1} parent=1 // pred_check
      _
    $region47: #{tpu_custom_call.1} parent=1 // pred_check_branch
      %317 = sbr.rel (0) target = $region49
    $region48: #{tpu_custom_call.1} parent=1 // pred_region
      %s319 = ssub.s32 128, 128
      %320 = vsyncadd [#allocation10], %s319
      %s322 = sshll.u32 [#allocation9], 4
      %s323 = int_to_ptr.vmem [resolvable:$true] %s322
      %325 = dma.vmem_to_hbm [thread:$0]  %s323, 128, %s6, [#allocation10]
    $region49: #{tpu_custom_call.1} parent=1 // pred_fallthru
      _
    // Predicated region
    $region50: #{tpu_custom_call.1} parent=1 // pred_check
      _
    $region51: #{tpu_custom_call.1} parent=1 // pred_check_branch
      %327 = sbr.rel (0) target = $region53
    $region52: #{tpu_custom_call.1} parent=1 // pred_region
      %328 = dma.done [#allocation4], 128
    $region53: #{tpu_custom_call.1} parent=1 // pred_fallthru
      _
    // Predicated region
    $region54: #{tpu_custom_call.1} parent=1 // pred_check
      _
    $region55: #{tpu_custom_call.1} parent=1 // pred_check_branch
      %330 = sbr.rel (0) target = $region57
    $region56: #{tpu_custom_call.1} parent=1 // pred_region
      %331 = dma.done [#allocation10], 128
    $region57: #{tpu_custom_call.1} parent=1 // pred_fallthru
      _
    %332 = vsyncpa [#allocation3], 1
    %333 = vsyncpa [#allocation6], 1
    %334 = vsyncpa [#allocation4], 1
    %335 = vsyncpa [#allocation10], 1

</llo_original>
